<compile_context>
chip_gen: v7x
topology: tpu7x:2x2x1
jax: 0.10.0
libtpu: 0.0.40
codegen_flags: <defaults>
</compile_context>

<pallas_src>
import jax
import jax.numpy as jnp
from jax.experimental import pallas as pl
from jax.experimental.pallas import tpu as pltpu

_VMEM_LIMIT_BYTES = 32 * 1024 * 1024  # safe on v5e/v6e (128 MiB phys) and v7x (64 MiB phys)


def _matmul_kernel(x_ref, w_ref, o_ref):
    # x_ref: (tile_rows, K) streamed VMEM tile; w_ref: (K, P) grid-invariant weight;
    # o_ref: (tile_rows, P).  Single MXU op; f32 accumulation.
    # Note: on v6e/v7x an f32 dot is a multi-pass bf16 MXU decomposition; this
    # kernel is HBM-bound for f32 inputs so that cadence stays hidden.  If the
    # caller streams bf16 inputs the matmul becomes single-pass automatically.
    o_ref[...] = jnp.dot(
        x_ref[...], w_ref[...], preferred_element_type=jnp.float32
    ).astype(o_ref.dtype)


def _sublane_multiple(dtype):
    # Sub-32-bit dtypes pack along sublanes: 8 rows for 4-byte, 16 for 2-byte,
    # 32 for 1-byte elements.
    return max(8, 32 // jnp.dtype(dtype).itemsize)


def _pick_row_tile(
    total_rows,
    row_bytes,
    dtype,
    *,
    target_rows=8192,
    vmem_per_buffer=4 * 1024 * 1024,
    min_blocks=8,
):
    """Rows per grid block: sublane-multiple, VMEM-capped, megacore-balanced."""
    sub = _sublane_multiple(dtype)
    if total_rows <= sub:
        # Single block == full array dim (exempt from the sublane-multiple rule).
        return total_rows
    cap_rows = max(sub, (vmem_per_buffer // row_bytes) // sub * sub)
    tile = min(target_rows, cap_rows, (total_rows // sub) * sub)
    tile = max(sub, (tile // sub) * sub)
    # v7x megacore balance: when there is enough work, keep >= min_blocks blocks
    # so the ("parallel",) grid actually feeds both TensorCores.
    if total_rows >= min_blocks * sub:
        balanced = max(sub, (total_rows // min_blocks) // sub * sub)
        tile = min(tile, balanced)
    return tile


def _gemv(x2d, w_cols, tile_rows, out_cols):
    """pallas_call for (R, K) @ (K, out_cols), batch axis tiled over the grid."""
    R, K = x2d.shape
    in_itemsize = jnp.dtype(x2d.dtype).itemsize
    out_itemsize = jnp.dtype(x2d.dtype).itemsize
    grid = (pl.cdiv(R, tile_rows),)
    cost = pl.CostEstimate(
        flops=2 * R * K * out_cols,
        transcendentals=0,
        bytes_accessed=(
            R * K * in_itemsize            # streamed x
            + K * out_cols * in_itemsize   # weight (read once)
            + R * out_cols * out_itemsize  # output writeback
        ),
    )
    return pl.pallas_call(
        _matmul_kernel,
        out_shape=jax.ShapeDtypeStruct((R, out_cols), x2d.dtype),
        grid_spec=pltpu.PrefetchScalarGridSpec(
            num_scalar_prefetch=0,
            grid=grid,
            in_specs=[
                pl.BlockSpec((tile_rows, K), lambda i: (i, 0)),  # streamed x tile
                # Grid-invariant weight block (tiny); Pallas skips the re-DMA since
                # the block index never changes.
                pl.BlockSpec((K, out_cols), lambda i: (0, 0)),
            ],
            out_specs=pl.BlockSpec((tile_rows, out_cols), lambda i: (i, 0)),
        ),
        compiler_params=pltpu.CompilerParams(
            # Batch blocks are independent -> megacore sharding on v7x.
            dimension_semantics=("parallel",),
            vmem_limit_bytes=_VMEM_LIMIT_BYTES,
        ),
        cost_estimate=cost,
    )(x2d, w_cols)


def distmult_simple_predictor(x, weight):
    """x: (N, H); weight: (1, H) (torch nn.Linear layout) -> (N, 1)."""
    N, H = x.shape
    assert weight.shape == (1, H)
    itemsize = jnp.dtype(x.dtype).itemsize

    pack = 128 // H if (0 < H <= 128 and 128 % H == 0) else 1
    if pack > 1 and N % pack == 0:
        # ---- packed path: P logical rows per 128-lane VMEM row ----
        rows = N // pack
        x_packed = x.reshape(rows, pack * H)  # contiguous row-major -> free reshape
        # Block-diagonal segmented weight: w_seg[p*H + h, p] = w[h], zeros elsewhere.
        w = weight.reshape(H).astype(x.dtype)
        w_seg = (
            jnp.eye(pack, dtype=x.dtype)[:, None, :] * w[None, :, None]
        ).reshape(pack * H, pack)  # (128, P)
        tile_rows = _pick_row_tile(rows, 128 * itemsize, x.dtype)
        out_packed = _gemv(x_packed, w_seg, tile_rows, pack)  # (rows, P)
        return out_packed.reshape(N, 1)  # contiguous -> free reshape

    # ---- general path: plain MXU GEMV, weight pre-transposed in the wrapper ----
    w_t = weight.reshape(H, 1).astype(x.dtype)  # (H, 1); no in-kernel transpose
    lane_padded = ((H + 127) // 128) * 128      # VMEM pads the last dim to 128 lanes
    tile_rows = _pick_row_tile(N, lane_padded * itemsize, x.dtype)
    # TODO(synk): if the 1-lane output store epilogue ever shows up in xprof,
    # emit a lane-dense (tile_rows/128, 128) output slab instead of (tile_rows, 1).
    # TODO(synk): if H ever exceeds ~a few thousand, add a K-reduction grid axis
    # (accumulator scratch + pl.when init/finalize) instead of keeping H resident.
    return _gemv(x, w_t, tile_rows, 1)


if __name__ == "__main__":
    key = jax.random.PRNGKey(0)
    kx, kw, kx2, kw2, kx3 = jax.random.split(key, 5)

    # --- primary check: packed (H divides 128) path, small shape ---
    hid_size, batch = 32, 32
    x = jax.random.normal(kx, (batch, hid_size), dtype=jnp.float32)
    # nn.Linear(hid_size, 1, bias=False) default init:
    # kaiming_uniform(a=sqrt(5)) -> U(-1/sqrt(hid_size), 1/sqrt(hid_size))
    bound = 1.0 / (hid_size ** 0.5)
    weight = jax.random.uniform(
        kw, (1, hid_size), dtype=jnp.float32, minval=-bound, maxval=bound
    )
    out = jax.block_until_ready(distmult_simple_predictor(x, weight))
    ref = jnp.sum(x * weight, axis=-1, keepdims=True)  # exact f32 reference for x @ W^T
    assert out.shape == (batch, 1)
    assert jnp.allclose(out, ref, atol=1e-5, rtol=1e-5), "packed path mismatch"

    # --- packed path, multi-block grid (exercises tiling + megacore balance) ---
    n_big = 4096
    x_big = jax.random.normal(kx3, (n_big, hid_size), dtype=jnp.float32)
    out_big = jax.block_until_ready(distmult_simple_predictor(x_big, weight))
    ref_big = jnp.sum(x_big * weight, axis=-1, keepdims=True)
    assert out_big.shape == (n_big, 1)
    assert jnp.allclose(out_big, ref_big, atol=1e-5, rtol=1e-5), "tiled packed mismatch"

    # --- secondary check: general MXU-GEMV path (H does not divide 128) ---
    h2, b2 = 200, 24
    x2 = jax.random.normal(kx2, (b2, h2), dtype=jnp.float32)
    bound2 = 1.0 / (h2 ** 0.5)
    w2 = jax.random.uniform(
        kw2, (1, h2), dtype=jnp.float32, minval=-bound2, maxval=bound2
    )
    out2 = jax.block_until_ready(distmult_simple_predictor(x2, w2))
    ref2 = jnp.sum(x2 * w2, axis=-1, keepdims=True)
    assert out2.shape == (b2, 1)
    assert jnp.allclose(out2, ref2, atol=1e-4, rtol=1e-4), "general path mismatch"

    print("KERNEL_OK")
</pallas_src>

<mosaic_0001>
module attributes {stable_mosaic.version = 11 : i64} {
  func.func @_matmul_kernel(%arg0: i32, %arg1: memref<8x128xf32, #tpu.memory_space<vmem>>, %arg2: memref<128x4xf32, #tpu.memory_space<vmem>>, %arg3: memref<8x4xf32, #tpu.memory_space<vmem>>) attributes {dimension_semantics = [#tpu.dimension_semantics<parallel>], iteration_bounds = array<i64: 1>, scalar_prefetch = 0 : i64, scratch_operands = 0 : i64, tpu.core_type = #tpu.core_type<tc>, window_params = [{transform_indices = @transform_0, window_bounds = array<i64: 8, 128>}, {pipeline_mode = #tpu.pipeline_mode<synchronous>, transform_indices = @transform_1, window_bounds = array<i64: 128, 4>}, {transform_indices = @transform_2, window_bounds = array<i64: 8, 4>}]} {
    %c0 = arith.constant 0 : index
    %c0_0 = arith.constant 0 : index
    %0 = vector.load %arg1[%c0, %c0_0] : memref<8x128xf32, #tpu.memory_space<vmem>>, vector<8x128xf32>
    %c0_1 = arith.constant 0 : index
    %c0_2 = arith.constant 0 : index
    %1 = vector.load %arg2[%c0_1, %c0_2] : memref<128x4xf32, #tpu.memory_space<vmem>>, vector<128x4xf32>
    %cst = arith.constant dense<0.000000e+00> : vector<8x4xf32>
    %2 = tpu.matmul %0, %1, %cst {dimension_numbers = #tpu.dot_dimension_numbers<[1], [0], [0], [1], [0, 0, 1, 1], [], []>} : vector<8x128xf32>, vector<128x4xf32>, vector<8x4xf32> -> vector<8x4xf32>
    %c0_3 = arith.constant 0 : index
    %c0_4 = arith.constant 0 : index
    %3 = vector.load %arg3[%c0_3, %c0_4] : memref<8x4xf32, #tpu.memory_space<vmem>>, vector<8x4xf32>
    tpu.vector_store %arg3[%c0_3, %c0_4], %2 {strides = array<i32>} : memref<8x4xf32, #tpu.memory_space<vmem>>, vector<8x4xf32>,
    return
  }
  func.func @transform_0(%arg0: i32) -> (i32, i32) {
    %c0_i32 = arith.constant 0 : i32
    %c0_i32_0 = arith.constant 0 : i32
    return %arg0, %c0_i32 : i32, i32
  }
  func.func @transform_1(%arg0: i32) -> (i32, i32) {
    %c0_i32 = arith.constant 0 : i32
    %c0_i32_0 = arith.constant 0 : i32
    %c0_i32_1 = arith.constant 0 : i32
    return %c0_i32, %c0_i32_0 : i32, i32
  }
  func.func @transform_2(%arg0: i32) -> (i32, i32) {
    %c0_i32 = arith.constant 0 : i32
    %c0_i32_0 = arith.constant 0 : i32
    return %arg0, %c0_i32 : i32, i32
  }
}

</mosaic_0001>

<llo_original>
// kernel: tpu_custom_call.1
$region0: #{tpu_custom_call.1}
  #allocation0 [shape = 'u32[]', space=smem, size = 0x4, offset = 0x4, fixed_abs, tag = 'smem constant byte address 0x4 - core index']
  #allocation1 [shape = 'u32[144,128]{1,0:T(1,128)}', space=vmem, size = 0x12000, scoped, tag = 'internal scratch']
  %s0 = inlined_call_operand.vmem [shape: f32[8,128], index: 0, kind: input, shape index: {}]
  %s1 = inlined_call_operand.vmem [shape: f32[128,4], index: 1, kind: input, shape index: {}]
  %s2 = inlined_call_operand.vmem [shape: f32[8,4], index: 2, kind: output, shape index: {}]
  %s3 = sld [smem:[#allocation0]]
  $region18: #{tpu_custom_call.1} parent=0
    _
  %s5 = ssub.s32 1, %s3
  %s6 = scalar_select 0, %s5, %s3
  // Predicated region
  $region2: #{tpu_custom_call.1} parent=0 // pred_check
    _
  $region3: #{tpu_custom_call.1} parent=0 // pred_check_branch
    %8 = sbr.rel (0) target = $region5
  $region4: #{tpu_custom_call.1} parent=0 // pred_region
    _
  $region5: #{tpu_custom_call.1} parent=0 // pred_fallthru
    _
  // Predicated region
  $region6: #{tpu_custom_call.1} parent=0 // pred_check
    _
  $region7: #{tpu_custom_call.1} parent=0 // pred_check_branch
    %10 = sbr.rel (0) target = $region9
  $region8: #{tpu_custom_call.1} parent=0 // pred_region
    _
  $region9: #{tpu_custom_call.1} parent=0 // pred_fallthru
    _
  %v11 = vld [vmem:[%s0] sm:$0xff]
  %v12 = vld [vmem:[%s1] sm:$0xff]
  %v13 = vld [vmem:[%s1 + $0x8] sm:$0xff]
  %v14 = vld [vmem:[%s1 + $0x10] sm:$0xff]
  %v15 = vld [vmem:[%s1 + $0x18] sm:$0xff]
  %v16 = vld [vmem:[%s1 + $0x20] sm:$0xff]
  %v17 = vld [vmem:[%s1 + $0x28] sm:$0xff]
  %v18 = vld [vmem:[%s1 + $0x30] sm:$0xff]
  %v19 = vld [vmem:[%s1 + $0x38] sm:$0xff]
  %v20 = vld [vmem:[%s1 + $0x40] sm:$0xff]
  %v21 = vld [vmem:[%s1 + $0x48] sm:$0xff]
  %v22 = vld [vmem:[%s1 + $0x50] sm:$0xff]
  %v23 = vld [vmem:[%s1 + $0x58] sm:$0xff]
  %v24 = vld [vmem:[%s1 + $0x60] sm:$0xff]
  %v25 = vld [vmem:[%s1 + $0x68] sm:$0xff]
  %v26 = vld [vmem:[%s1 + $0x70] sm:$0xff]
  %v27 = vld [vmem:[%s1 + $0x78] sm:$0xff]
  %28 = vmatprep.subr.mxu0 0.0
  %29 = vmatpush1.msra.mxu0 %v12
  %30 = vmatprep.subr.mxu0 0.0
  %31 = vmatpush1.msra.mxu0 %v13
  %32 = vmatprep.subr.mxu0 0.0
  %33 = vmatpush1.msra.mxu0 %v14
  %34 = vmatprep.subr.mxu0 0.0
  %35 = vmatpush1.msra.mxu0 %v15
  %36 = vmatprep.subr.mxu0 0.0
  %37 = vmatpush1.msra.mxu0 %v16
  %38 = vmatprep.subr.mxu0 0.0
  %39 = vmatpush1.msra.mxu0 %v17
  %40 = vmatprep.subr.mxu0 0.0
  %41 = vmatpush1.msra.mxu0 %v18
  %42 = vmatprep.subr.mxu0 0.0
  %43 = vmatpush1.msra.mxu0 %v19
  %44 = vmatprep.subr.mxu0 0.0
  %45 = vmatpush1.msra.mxu0 %v20
  %46 = vmatprep.subr.mxu0 0.0
  %47 = vmatpush1.msra.mxu0 %v21
  %48 = vmatprep.subr.mxu0 0.0
  %49 = vmatpush1.msra.mxu0 %v22
  %50 = vmatprep.subr.mxu0 0.0
  %51 = vmatpush1.msra.mxu0 %v23
  %52 = vmatprep.subr.mxu0 0.0
  %53 = vmatpush1.msra.mxu0 %v24
  %54 = vmatprep.subr.mxu0 0.0
  %55 = vmatpush1.msra.mxu0 %v25
  %56 = vmatprep.subr.mxu0 0.0
  %57 = vmatpush1.msra.mxu0 %v26
  %58 = vmatprep.subr.mxu0 0.0
  %59 = vmatpush1.msra.mxu0 %v27
  %60 = vmatprep.subr.mxu0 0.0
  %61 = vmatpush1.msra.mxu0 0.0
  %62 = vmatprep.subr.mxu0 0.0
  %63 = vmatpush1.msra.mxu0 0.0
  %64 = vmatprep.subr.mxu0 0.0
  %65 = vmatpush1.msra.mxu0 0.0
  %66 = vmatprep.subr.mxu0 0.0
  %67 = vmatpush1.msra.mxu0 0.0
  %68 = vmatprep.subr.mxu0 0.0
  %69 = vmatpush1.msra.mxu0 0.0
  %70 = vmatprep.subr.mxu0 0.0
  %71 = vmatpush1.msra.mxu0 0.0
  %72 = vmatprep.subr.mxu0 0.0
  %73 = vmatpush1.msra.mxu0 0.0
  %74 = vmatprep.subr.mxu0 0.0
  %75 = vmatpush1.msra.mxu0 0.0
  %76 = vmatprep.subr.mxu0 0.0
  %77 = vmatpush1.msra.mxu0 0.0
  %78 = vmatprep.subr.mxu0 0.0
  %79 = vmatpush1.msra.mxu0 0.0
  %80 = vmatprep.subr.mxu0 0.0
  %81 = vmatpush1.msra.mxu0 0.0
  %82 = vmatprep.subr.mxu0 0.0
  %83 = vmatpush1.msra.mxu0 0.0
  %84 = vmatprep.subr.mxu0 0.0
  %85 = vmatpush1.msra.mxu0 0.0
  %86 = vmatprep.subr.mxu0 0.0
  %87 = vmatpush1.msra.mxu0 0.0
  %88 = vmatprep.subr.mxu0 0.0
  %89 = vmatpush1.msra.mxu0 0.0
  %90 = vmatprep.subr.mxu0 0.0
  %91 = vmatpush1.msra.mxu0 0.0
  %92 = vmatprep.mubr.f32.mxu0 0.0
  %93 = vmatmul.mubr.f32.gmra.mrb[0].mxu0 %v11
  %v94 = vpop.f32.mrb[0].mxu0
  %v95 = vadd.f32 0.0, %v94
  %v96 = vpop.f32.mrb[0].mxu0
  %97 = vdwg.mxu0
  %vm98 = vcmask 31744
  %99 = vst.msk [vmem:[%s2] sm:$0xff] %vm98, %v95
  // Predicated region
  $region10: #{tpu_custom_call.1} parent=0 // pred_check
    _
  $region11: #{tpu_custom_call.1} parent=0 // pred_check_branch
    %101 = sbr.rel (0) target = $region13
  $region12: #{tpu_custom_call.1} parent=0 // pred_region
    _
  $region13: #{tpu_custom_call.1} parent=0 // pred_fallthru
    _
  // Predicated region
  $region14: #{tpu_custom_call.1} parent=0 // pred_check
    _
  $region15: #{tpu_custom_call.1} parent=0 // pred_check_branch
    %103 = sbr.rel (0) target = $region17
  $region16: #{tpu_custom_call.1} parent=0 // pred_region
    _
  $region17: #{tpu_custom_call.1} parent=0 // pred_fallthru
    _

</llo_original>
